<compile_context>
chip_gen: v5e
topology: v5e:2x2
jax: 0.10.0
libtpu: 0.0.40
codegen_flags: <defaults>
</compile_context>

<pallas_src>
import functools

import numpy as np
import jax
import jax.numpy as jnp
from jax.experimental import pallas as pl
from jax.experimental.pallas import tpu as pltpu


# ----------------------------- exact GELU (erf) ------------------------------
def _erf(x):
    # Abramowitz & Stegun 7.1.26 polynomial erf approximation (max abs err ~1.5e-7).
    # Uses an exact divide (NOT pl.reciprocal(approx=True)) per the accuracy review.
    p = 0.3275911
    a1, a2, a3, a4, a5 = (0.254829592, -0.284496736, 1.421413741,
                          -1.453152027, 1.061405429)
    sign = jnp.where(x >= 0.0, 1.0, -1.0)
    z = jnp.abs(x)
    t = 1.0 / (1.0 + p * z)
    poly = t * (a1 + t * (a2 + t * (a3 + t * (a4 + t * a5))))
    return sign * (1.0 - poly * jnp.exp(-z * z))


def _gelu_exact(x):
    # torch.nn.GELU() default (approximate='none'): 0.5 * x * (1 + erf(x / sqrt(2)))
    return 0.5 * x * (1.0 + _erf(x * 0.7071067811865476))


# ------------------------------- Pallas kernel -------------------------------
def _fused_adapter_kernel(x_ref, wdn_ref, wup_ref, m_ref,
                          w1_ref, b1_ref, w2_ref, b2_ref, o_ref):
    """One grid step == one adapter layer for one batch block.

    x_ref  : [R, D] f32   input rows (read only at layer 0); R = batch_block * S
    wdn_ref: [R, 1] f32   edge weight to the previous row (A_hat sub-diagonal)
    wup_ref: [R, 1] f32   edge weight to the next row     (A_hat super-diagonal)
    m_ref  : [R, 1] f32   {0,1} residual mask (valid tokens)
    w1_ref : [1, D, G] bf16  GCNConv weight    b1_ref: [1, 1, G] f32  GCNConv bias
    w2_ref : [1, G, D] bf16  output Linear W   b2_ref: [1, 1, D] f32  Linear bias
    o_ref  : [R, D] f32   resident running activations / final output
    """
    layer = pl.program_id(1)

    # Layer 0: seed the resident activation block (stays in VMEM across all layers
    # of this batch block; written back to HBM once at the end).
    @pl.when(layer == 0)
    def _():
        o_ref[...] = x_ref[...]

    x = o_ref[...]                                     # [R, D] f32
    rows = x.shape[0]

    # GCNConv linear: X @ W1 (bf16 operands, f32 accumulation on the MXU).
    h = jnp.dot(x.astype(jnp.bfloat16), w1_ref[0],
                preferred_element_type=jnp.float32)    # [R, G]

    # Neighborhood aggregation A_hat @ h. A_hat is tridiagonal (bidirectional chain
    # over valid tokens), so it reduces to two sublane rolls (XLU) + two VPU madds.
    # Wraparound rows and cross-sequence rows are killed by the zero boundary weights.
    h_dn = pltpu.roll(h, shift=1, axis=0)              # h[i-1] at row i
    h_up = pltpu.roll(h, shift=rows - 1, axis=0)       # h[i+1] at row i
    h = wdn_ref[...] * h_dn + wup_ref[...] * h_up + b1_ref[0]

    h = _gelu_exact(h)                                 # nn.GELU() (exact erf form)

    # nn.Linear(graph_hid_dim, input_dim); nn.Dropout(0.0) is identity.
    out = jnp.dot(h.astype(jnp.bfloat16), w2_ref[0],
                  preferred_element_type=jnp.float32)  # [R, D]
    out = out + b2_ref[0]

    # x[mask] = x[mask] + nodes_emb  (residual only on valid rows; 1-lane mask
    # broadcast happens on the VPU, hidden under the matmuls).
    o_ref[...] = x + m_ref[...] * out


# ------------------------------ module wrapper --------------------------------
def multi_graph_conv_adapter(x, pad_mask, a_hat, params, *,
                             batch_block=1, vmem_limit_bytes=None):
    """MultiGraphConvAdapter.forward(x, pad_mask) -> (x, info).

    a_hat must be the tridiagonal (bidirectional-chain) normalized adjacency;
    only its sub/super-diagonals reach the kernel.
    """
    B, S, D = x.shape
    L = len(params)
    G = params[0][0].shape[1]
    assert B % batch_block == 0
    R = batch_block * S

    # Stack per-layer parameters along a leading layer axis (matmul weights in bf16:
    # half the DMA bytes / VMEM, MXU-native; biases stay f32 for the VPU path).
    w1s = jnp.stack([p[0] for p in params]).astype(jnp.bfloat16)     # [L, D, G]
    b1s = jnp.stack([p[1] for p in params]).astype(jnp.float32)      # [L, 1, G]
    w2s = jnp.stack([p[2] for p in params]).astype(jnp.bfloat16)     # [L, G, D]
    b2s = jnp.stack([p[3] for p in params]).astype(jnp.float32)      # [L, 1, D]

    # Extract the chain edge weights from the tridiagonal A_hat (layer-invariant):
    #   w_up[b, i] = A_hat[b, i, i+1]  (0 at i = S-1),  w_dn[b, i] = A_hat[b, i, i-1].
    sup = jnp.diagonal(a_hat, offset=1, axis1=1, axis2=2)            # [B, S-1]
    sub = jnp.diagonal(a_hat, offset=-1, axis1=1, axis2=2)           # [B, S-1]
    w_up = jnp.pad(sup, ((0, 0), (0, 1))).reshape(B * S, 1).astype(jnp.float32)
    w_dn = jnp.pad(sub, ((0, 0), (1, 0))).reshape(B * S, 1).astype(jnp.float32)

    # 1-lane residual mask (no x-sized mask in HBM/VMEM).
    mask_f = pad_mask.reshape(B * S, 1).astype(jnp.float32)

    x_flat = x.reshape(B * S, D)

    rows_map = lambda b, l: (b, 0)          # layer-invariant: DMA'd once per batch block
    per_layer = lambda b, l: (l, 0, 0)      # pipelined per-layer weight prefetch

    out = pl.pallas_call(
        _fused_adapter_kernel,
        grid=(B // batch_block, L),
        in_specs=[
            pl.BlockSpec((R, D), rows_map),         # x (seed)
            pl.BlockSpec((R, 1), rows_map),         # A_hat sub-diagonal weights
            pl.BlockSpec((R, 1), rows_map),         # A_hat super-diagonal weights
            pl.BlockSpec((R, 1), rows_map),         # residual mask
            pl.BlockSpec((1, D, G), per_layer),     # W_gcn
            pl.BlockSpec((1, 1, G), per_layer),     # b_gcn
            pl.BlockSpec((1, G, D), per_layer),     # W_lin
            pl.BlockSpec((1, 1, D), per_layer),     # b_lin
        ],
        out_specs=pl.BlockSpec((R, D), rows_map),   # resident accumulator across layers
        out_shape=jax.ShapeDtypeStruct((B * S, D), x.dtype),
        input_output_aliases={0: 0},                # activation buffer aliased/donated
        compiler_params=pltpu.CompilerParams(
            dimension_semantics=("parallel", "arbitrary"),
            vmem_limit_bytes=vmem_limit_bytes),
    )(x_flat, w_dn, w_up, mask_f, w1s, b1s, w2s, b2s)

    # acum_edges=False and GraphConvAdapter returns no edge info -> info is None
    return out.reshape(B, S, D), None


# ---------------------------------- reference ----------------------------------
def _reference(x, pad_mask, a_hat, params):
    mf = pad_mask[..., None].astype(x.dtype)                          # [B, S, 1]
    for (w1, b1, w2, b2) in params:
        h = jnp.einsum("bij,bjg->big", a_hat, x @ w1) + b1
        h = jax.nn.gelu(h, approximate=False)                         # exact erf GELU
        out = h @ w2 + b2
        x = x + mf * out
    return x


# ------------------------------- setup helpers ---------------------------------
def build_chain_adjacency(lengths, B, S):
    """Per-sequence GCN-normalized adjacency, block-diagonal form [B, S, S].

    Edges: bidirectional chain over the masked (valid) tokens of each sequence,
    normalization D^{-1/2} A D^{-1/2} as in PyG gcn_norm with add_self_loops=False.
    """
    A = np.zeros((B, S, S), np.float32)
    for b in range(B):
        Lb = int(lengths[b])
        for i in range(Lb - 1):
            A[b, i + 1, i] = 1.0   # edge i -> i+1
            A[b, i, i + 1] = 1.0   # edge i+1 -> i
    deg = A.sum(axis=2)                                            # [B, S]
    dinv = np.where(deg > 0, 1.0 / np.sqrt(np.maximum(deg, 1e-12)), 0.0)
    a_hat = dinv[:, :, None] * A * dinv[:, None, :]
    return jnp.asarray(a_hat, jnp.float32)


def init_params(key, num_layers, D, G):
    params = []
    for _ in range(num_layers):
        key, k1, k2, k3, k4 = jax.random.split(key, 5)
        w1 = 0.05 * jax.random.normal(k1, (D, G), jnp.float32)   # GCNConv.lin.weight^T
        b1 = 0.05 * jax.random.normal(k2, (1, G), jnp.float32)   # GCNConv.bias
        w2 = 0.05 * jax.random.normal(k3, (G, D), jnp.float32)   # Linear.weight^T
        b2 = 0.05 * jax.random.normal(k4, (1, D), jnp.float32)   # Linear.bias
        params.append((w1, b1, w2, b2))
    return params


# ------------------------------------ main -------------------------------------
if __name__ == "__main__":
    B, S, D, G = 2, 16, 128, 128          # batch, seq, input_dim, graph_hid_dim
    NUM_LAYERS = 2                         # MultiGraphConvAdapter(num_layers=2)

    key = jax.random.PRNGKey(0)
    key, kx = jax.random.split(key)
    x = jax.random.normal(kx, (B, S, D), jnp.float32)

    lengths = np.array([12, 10])           # valid (non-pad) tokens per sequence
    pad_mask = jnp.asarray(np.arange(S)[None, :] < lengths[:, None])   # [B, S] bool

    a_hat = build_chain_adjacency(lengths, B, S)                       # [B, S, S]
    params = init_params(key, NUM_LAYERS, D, G)

    # Reference computed first (the kernel aliases/donates its activation buffer).
    ref = _reference(x, pad_mask, a_hat, params)

    # batch_block=1 exercises the batch-parallel grid axis (v7x megacore path);
    # on v6e/v5e use batch_block=B to maximize MXU row fill per matmul.
    fwd = jax.jit(functools.partial(multi_graph_conv_adapter, batch_block=1))
    out, info = fwd(x, pad_mask, a_hat, params)
    out = jax.block_until_ready(out)

    np.testing.assert_allclose(np.asarray(out), np.asarray(ref), rtol=5e-2, atol=5e-2)

    print("KERNEL_OK")
</pallas_src>

<mosaic_0001>
module attributes {stable_mosaic.version = 11 : i64} {
  func.func @_fused_adapter_kernel(%arg0: i32, %arg1: i32, %arg2: memref<16x128xf32, #tpu.memory_space<vmem>>, %arg3: memref<16x1xf32, #tpu.memory_space<vmem>>, %arg4: memref<16x1xf32, #tpu.memory_space<vmem>>, %arg5: memref<16x1xf32, #tpu.memory_space<vmem>>, %arg6: memref<1x128x128xbf16, #tpu.memory_space<vmem>>, %arg7: memref<1x1x128xf32, #tpu.memory_space<vmem>>, %arg8: memref<1x128x128xbf16, #tpu.memory_space<vmem>>, %arg9: memref<1x1x128xf32, #tpu.memory_space<vmem>>, %arg10: memref<16x128xf32, #tpu.memory_space<vmem>>) attributes {dimension_semantics = [#tpu.dimension_semantics<parallel>, #tpu.dimension_semantics<arbitrary>], iteration_bounds = array<i64: 2, 2>, scalar_prefetch = 0 : i64, scratch_operands = 0 : i64, tpu.core_type = #tpu.core_type<tc>, window_params = [{transform_indices = @transform_0, window_bounds = array<i64: 16, 128>}, {transform_indices = @transform_1, window_bounds = array<i64: 16, 1>}, {transform_indices = @transform_2, window_bounds = array<i64: 16, 1>}, {transform_indices = @transform_3, window_bounds = array<i64: 16, 1>}, {transform_indices = @transform_4, window_bounds = array<i64: 1, 128, 128>}, {transform_indices = @transform_5, window_bounds = array<i64: 1, 1, 128>}, {transform_indices = @transform_6, window_bounds = array<i64: 1, 128, 128>}, {transform_indices = @transform_7, window_bounds = array<i64: 1, 1, 128>}, {transform_indices = @transform_8, window_bounds = array<i64: 16, 128>}]} {
    %c0_i32 = arith.constant 0 : i32
    %0 = arith.cmpi eq, %arg1, %c0_i32 : i32
    %1 = arith.extui %0 : i1 to i32
    %c0_i32_0 = arith.constant 0 : i32
    %2 = arith.cmpi ne, %1, %c0_i32_0 : i32
    scf.if %2 {
      %c0_39 = arith.constant 0 : index
      %c0_40 = arith.constant 0 : index
      %75 = vector.load %arg2[%c0_39, %c0_40] : memref<16x128xf32, #tpu.memory_space<vmem>>, vector<16x128xf32>
      %c0_41 = arith.constant 0 : index
      %c0_42 = arith.constant 0 : index
      %76 = vector.load %arg10[%c0_41, %c0_42] : memref<16x128xf32, #tpu.memory_space<vmem>>, vector<16x128xf32>
      tpu.vector_store %arg10[%c0_41, %c0_42], %75 {strides = array<i32>} : memref<16x128xf32, #tpu.memory_space<vmem>>, vector<16x128xf32>,
    } else {
    }
    %c0 = arith.constant 0 : index
    %c0_1 = arith.constant 0 : index
    %3 = vector.load %arg10[%c0, %c0_1] : memref<16x128xf32, #tpu.memory_space<vmem>>, vector<16x128xf32>
    %4 = arith.truncf %3 : vector<16x128xf32> to vector<16x128xbf16>
    %c0_2 = arith.constant 0 : index
    %c0_3 = arith.constant 0 : index
    %c0_4 = arith.constant 0 : index
    %5 = vector.load %arg6[%c0_2, %c0_3, %c0_4] : memref<1x128x128xbf16, #tpu.memory_space<vmem>>, vector<1x128x128xbf16>
    %6 = vector.shape_cast %5 : vector<1x128x128xbf16> to vector<128x128xbf16>
    %cst = arith.constant dense<0.000000e+00> : vector<16x128xf32>
    %7 = tpu.matmul %4, %6, %cst {dimension_numbers = #tpu.dot_dimension_numbers<[1], [0], [0], [1], [0, 0, 1, 1], [], []>} : vector<16x128xbf16>, vector<128x128xbf16>, vector<16x128xf32> -> vector<16x128xf32>
    %c1_i32 = arith.constant 1 : i32
    %8 = tpu.dynamic_rotate %7 by %c1_i32 dim 0 : vector<16x128xf32>, i32 -> vector<16x128xf32>
    %c15_i32 = arith.constant 15 : i32
    %9 = tpu.dynamic_rotate %7 by %c15_i32 dim 0 : vector<16x128xf32>, i32 -> vector<16x128xf32>
    %c0_5 = arith.constant 0 : index
    %c0_6 = arith.constant 0 : index
    %10 = vector.load %arg3[%c0_5, %c0_6] : memref<16x1xf32, #tpu.memory_space<vmem>>, vector<16x1xf32>
    %11 = vector.broadcast %10 : vector<16x1xf32> to vector<16x128xf32>
    %12 = arith.mulf %11, %8 : vector<16x128xf32>
    %c0_7 = arith.constant 0 : index
    %c0_8 = arith.constant 0 : index
    %13 = vector.load %arg4[%c0_7, %c0_8] : memref<16x1xf32, #tpu.memory_space<vmem>>, vector<16x1xf32>
    %14 = vector.broadcast %13 : vector<16x1xf32> to vector<16x128xf32>
    %15 = arith.mulf %14, %9 : vector<16x128xf32>
    %16 = arith.addf %12, %15 : vector<16x128xf32>
    %c0_9 = arith.constant 0 : index
    %c0_10 = arith.constant 0 : index
    %c0_11 = arith.constant 0 : index
    %17 = vector.load %arg7[%c0_9, %c0_10, %c0_11] : memref<1x1x128xf32, #tpu.memory_space<vmem>>, vector<1x1x128xf32>
    %18 = vector.shape_cast %17 : vector<1x1x128xf32> to vector<1x128xf32>
    %19 = vector.broadcast %18 : vector<1x128xf32> to vector<16x128xf32>
    %20 = arith.addf %16, %19 : vector<16x128xf32>
    %cst_12 = arith.constant 5.000000e-01 : f32
    %21 = vector.broadcast %cst_12 : f32 to vector<16x128xf32>
    %22 = arith.mulf %21, %20 : vector<16x128xf32>
    %cst_13 = arith.constant 0.707106769 : f32
    %23 = vector.broadcast %cst_13 : f32 to vector<16x128xf32>
    %24 = arith.mulf %20, %23 : vector<16x128xf32>
    %cst_14 = arith.constant 0.000000e+00 : f32
    %25 = vector.broadcast %cst_14 : f32 to vector<16x128xf32>
    %26 = arith.cmpf oge, %24, %25 : vector<16x128xf32>
    %cst_15 = arith.constant 1.000000e+00 : f32
    %cst_16 = arith.constant -1.000000e+00 : f32
    %27 = vector.broadcast %cst_15 : f32 to vector<16x128xf32>
    %28 = vector.broadcast %cst_16 : f32 to vector<16x128xf32>
    %29 = arith.select %26, %27, %28 : vector<16x128xi1>, vector<16x128xf32>
    %30 = math.absf %24 : vector<16x128xf32>
    %cst_17 = arith.constant 0.327591091 : f32
    %31 = vector.broadcast %cst_17 : f32 to vector<16x128xf32>
    %32 = arith.mulf %31, %30 : vector<16x128xf32>
    %cst_18 = arith.constant 1.000000e+00 : f32
    %33 = vector.broadcast %cst_18 : f32 to vector<16x128xf32>
    %34 = arith.addf %33, %32 : vector<16x128xf32>
    %cst_19 = arith.constant 1.000000e+00 : f32
    %35 = vector.broadcast %cst_19 : f32 to vector<16x128xf32>
    %36 = arith.divf %35, %34 : vector<16x128xf32>
    %cst_20 = arith.constant 1.06140542 : f32
    %37 = vector.broadcast %cst_20 : f32 to vector<16x128xf32>
    %38 = arith.mulf %36, %37 : vector<16x128xf32>
    %cst_21 = arith.constant -1.45315206 : f32
    %39 = vector.broadcast %cst_21 : f32 to vector<16x128xf32>
    %40 = arith.addf %39, %38 : vector<16x128xf32>
    %41 = arith.mulf %36, %40 : vector<16x128xf32>
    %cst_22 = arith.constant 1.42141378 : f32
    %42 = vector.broadcast %cst_22 : f32 to vector<16x128xf32>
    %43 = arith.addf %42, %41 : vector<16x128xf32>
    %44 = arith.mulf %36, %43 : vector<16x128xf32>
    %cst_23 = arith.constant -0.284496725 : f32
    %45 = vector.broadcast %cst_23 : f32 to vector<16x128xf32>
    %46 = arith.addf %45, %44 : vector<16x128xf32>
    %47 = arith.mulf %36, %46 : vector<16x128xf32>
    %cst_24 = arith.constant 0.254829586 : f32
    %48 = vector.broadcast %cst_24 : f32 to vector<16x128xf32>
    %49 = arith.addf %48, %47 : vector<16x128xf32>
    %50 = arith.mulf %36, %49 : vector<16x128xf32>
    %cst_25 = arith.constant 0.000000e+00 : f32
    %51 = vector.broadcast %cst_25 : f32 to vector<16x128xf32>
    %52 = arith.subf %51, %30 : vector<16x128xf32>
    %53 = arith.mulf %52, %30 : vector<16x128xf32>
    %54 = math.exp %53 : vector<16x128xf32>
    %55 = arith.mulf %50, %54 : vector<16x128xf32>
    %cst_26 = arith.constant 1.000000e+00 : f32
    %56 = vector.broadcast %cst_26 : f32 to vector<16x128xf32>
    %57 = arith.subf %56, %55 : vector<16x128xf32>
    %58 = arith.mulf %29, %57 : vector<16x128xf32>
    %cst_27 = arith.constant 1.000000e+00 : f32
    %59 = vector.broadcast %cst_27 : f32 to vector<16x128xf32>
    %60 = arith.addf %59, %58 : vector<16x128xf32>
    %61 = arith.mulf %22, %60 : vector<16x128xf32>
    %62 = arith.truncf %61 : vector<16x128xf32> to vector<16x128xbf16>
    %c0_28 = arith.constant 0 : index
    %c0_29 = arith.constant 0 : index
    %c0_30 = arith.constant 0 : index
    %63 = vector.load %arg8[%c0_28, %c0_29, %c0_30] : memref<1x128x128xbf16, #tpu.memory_space<vmem>>, vector<1x128x128xbf16>
    %64 = vector.shape_cast %63 : vector<1x128x128xbf16> to vector<128x128xbf16>
    %cst_31 = arith.constant dense<0.000000e+00> : vector<16x128xf32>
    %65 = tpu.matmul %62, %64, %cst_31 {dimension_numbers = #tpu.dot_dimension_numbers<[1], [0], [0], [1], [0, 0, 1, 1], [], []>} : vector<16x128xbf16>, vector<128x128xbf16>, vector<16x128xf32> -> vector<16x128xf32>
    %c0_32 = arith.constant 0 : index
    %c0_33 = arith.constant 0 : index
    %c0_34 = arith.constant 0 : index
    %66 = vector.load %arg9[%c0_32, %c0_33, %c0_34] : memref<1x1x128xf32, #tpu.memory_space<vmem>>, vector<1x1x128xf32>
    %67 = vector.shape_cast %66 : vector<1x1x128xf32> to vector<1x128xf32>
    %68 = vector.broadcast %67 : vector<1x128xf32> to vector<16x128xf32>
    %69 = arith.addf %65, %68 : vector<16x128xf32>
    %c0_35 = arith.constant 0 : index
    %c0_36 = arith.constant 0 : index
    %70 = vector.load %arg5[%c0_35, %c0_36] : memref<16x1xf32, #tpu.memory_space<vmem>>, vector<16x1xf32>
    %71 = vector.broadcast %70 : vector<16x1xf32> to vector<16x128xf32>
    %72 = arith.mulf %71, %69 : vector<16x128xf32>
    %73 = arith.addf %3, %72 : vector<16x128xf32>
    %c0_37 = arith.constant 0 : index
    %c0_38 = arith.constant 0 : index
    %74 = vector.load %arg10[%c0_37, %c0_38] : memref<16x128xf32, #tpu.memory_space<vmem>>, vector<16x128xf32>
    tpu.vector_store %arg10[%c0_37, %c0_38], %73 {strides = array<i32>} : memref<16x128xf32, #tpu.memory_space<vmem>>, vector<16x128xf32>,
    return
  }
  func.func @transform_0(%arg0: i32, %arg1: i32) -> (i32, i32) {
    %c0_i32 = arith.constant 0 : i32
    %c0_i32_0 = arith.constant 0 : i32
    return %arg0, %c0_i32 : i32, i32
  }
  func.func @transform_1(%arg0: i32, %arg1: i32) -> (i32, i32) {
    %c0_i32 = arith.constant 0 : i32
    %c0_i32_0 = arith.constant 0 : i32
    return %arg0, %c0_i32 : i32, i32
  }
  func.func @transform_2(%arg0: i32, %arg1: i32) -> (i32, i32) {
    %c0_i32 = arith.constant 0 : i32
    %c0_i32_0 = arith.constant 0 : i32
    return %arg0, %c0_i32 : i32, i32
  }
  func.func @transform_3(%arg0: i32, %arg1: i32) -> (i32, i32) {
    %c0_i32 = arith.constant 0 : i32
    %c0_i32_0 = arith.constant 0 : i32
    return %arg0, %c0_i32 : i32, i32
  }
  func.func @transform_4(%arg0: i32, %arg1: i32) -> (i32, i32, i32) {
    %c0_i32 = arith.constant 0 : i32
    %c0_i32_0 = arith.constant 0 : i32
    %c0_i32_1 = arith.constant 0 : i32
    return %arg1, %c0_i32, %c0_i32_0 : i32, i32, i32
  }
  func.func @transform_5(%arg0: i32, %arg1: i32) -> (i32, i32, i32) {
    %c0_i32 = arith.constant 0 : i32
    %c0_i32_0 = arith.constant 0 : i32
    %c0_i32_1 = arith.constant 0 : i32
    return %arg1, %c0_i32, %c0_i32_0 : i32, i32, i32
  }
  func.func @transform_6(%arg0: i32, %arg1: i32) -> (i32, i32, i32) {
    %c0_i32 = arith.constant 0 : i32
    %c0_i32_0 = arith.constant 0 : i32
    %c0_i32_1 = arith.constant 0 : i32
    return %arg1, %c0_i32, %c0_i32_0 : i32, i32, i32
  }
  func.func @transform_7(%arg0: i32, %arg1: i32) -> (i32, i32, i32) {
    %c0_i32 = arith.constant 0 : i32
    %c0_i32_0 = arith.constant 0 : i32
    %c0_i32_1 = arith.constant 0 : i32
    return %arg1, %c0_i32, %c0_i32_0 : i32, i32, i32
  }
  func.func @transform_8(%arg0: i32, %arg1: i32) -> (i32, i32) {
    %c0_i32 = arith.constant 0 : i32
    %c0_i32_0 = arith.constant 0 : i32
    return %arg0, %c0_i32 : i32, i32
  }
}

</mosaic_0001>

<llo_original>
// kernel: multi_graph_conv_adapter.1
$region0: #{multi_graph_conv_adapter.1}
  #allocation0 [shape = 'u32[]', space=smem, size = 0x4, offset = 0x4, fixed_abs, tag = 'smem constant byte address 0x4 - core index']
  #allocation1 [shape = 'u32[72,128]{1,0:T(1,128)}', space=vmem, size = 0x9000, scoped, tag = 'internal scratch']
  %s0 = inlined_call_operand.vmem [shape: f32[32,128], index: 0, kind: input, shape index: {}, may-alias: {0,8}]
  %s1 = inlined_call_operand.vmem [shape: f32[32,1], index: 1, kind: input, shape index: {}]
  %s2 = inlined_call_operand.vmem [shape: f32[32,1], index: 2, kind: input, shape index: {}]
  %s3 = inlined_call_operand.vmem [shape: f32[32,1], index: 3, kind: input, shape index: {}]
  %s4 = inlined_call_operand.vmem [shape: bf16[2,128,128], index: 4, kind: input, shape index: {}]
  %s5 = inlined_call_operand.vmem [shape: f32[2,1,128], index: 5, kind: input, shape index: {}]
  %s6 = inlined_call_operand.vmem [shape: bf16[2,128,128], index: 6, kind: input, shape index: {}]
  %s7 = inlined_call_operand.vmem [shape: f32[2,1,128], index: 7, kind: input, shape index: {}]
  %s8 = inlined_call_operand.vmem [shape: f32[32,128], index: 8, kind: output, shape index: {}, may-alias: {0,8}]
  %s9 = sld [smem:[#allocation0]]
  $region69: #{multi_graph_conv_adapter.1} parent=0
    _
  %s11 = ssub.s32 1, %s9
  %s12 = scalar_select 0, %s11, %s9
  loop: start=0, step=1, limit=6
  $region2: #{multi_graph_conv_adapter.1} parent=0 // loop_pre_header
    _
  $region3: #{multi_graph_conv_adapter.1} parent=0 // loop_header
    %s14 = sphi 0, %s18
    %p15 = scmp.ge.s32.totalorder %s14, 6
    %s21 = sphi 0, %s33
    %s22 = sphi 0, %s29
    %s23 = sphi 0, %s21
    %s24 = sphi 0, %s22
    %s25 = sphi 0, %s23
    %s26 = sphi 0, %s24
    %s36 = sphi 0, %s38
    %s39 = sphi 0, %s36
    %s40 = sphi 0, %s39
    %s56 = sphi 0, %s40
    %s62 = sphi 0, %s64
    %s65 = sphi 0, %s62
    %s66 = sphi 0, %s65
    %s82 = sphi 0, %s66
    %s88 = sphi 0, %s90
    %s91 = sphi 0, %s88
    %s92 = sphi 0, %s91
    %s108 = sphi 0, %s92
    %s114 = sphi 0, %s116
    %s117 = sphi 0, %s114
    %s118 = sphi 0, %s117
    %s134 = sphi 0, %s118
    %s140 = sphi 0, %s142
    %s143 = sphi 0, %s140
    %s144 = sphi 0, %s143
    %s160 = sphi 0, %s144
    %s166 = sphi 0, %s168
    %s169 = sphi 0, %s166
    %s170 = sphi 0, %s169
    %s186 = sphi 0, %s170
    %s192 = sphi 0, %s194
    %s195 = sphi 0, %s192
    %s196 = sphi 0, %s195
    %s212 = sphi 0, %s196
    %s218 = sphi 0, %s220
    %s221 = sphi 0, %s218
    %s222 = sphi 0, %s221
    %s238 = sphi 0, %s222
    %s244 = sphi 0, %s246
    %s247 = sphi 0, %s244
    %s248 = sphi 0, %s247
    %s264 = sphi 0, %s248
  $region4: #{multi_graph_conv_adapter.1} parent=0 // loop_header_branch
    %17 = sbr.rel (%p15) target = $region8
  $region5: #{multi_graph_conv_adapter.1} parent=0 // loop_body
    %s19 = ssub.s32 %s14, 1
    %s20 = ssub.s32 %s14, 2
    %s27 = sadd.s32 1, %s22
    %p28 = scmp.ge.s32.totalorder %s27, 2
    %s29 = scalar_select %p28, 0, %s27
    %s30 = sadd.s32 1, %s21
    %s31 = scalar_select %p28, %s30, %s21
    %p32 = scmp.ge.s32.totalorder %s31, 2
    %s33 = scalar_select %p32, 0, %s31
    %s34 = ssub.s32 %s21, %s33
    %p35 = scmp.eq.s32.totalorder %s34, 0
    %s37 = sadd.s32 %s36, 1
    %s38 = scalar_select %p35, %s36, %s37
    %p41 = pneg %p35
    %p42 = scmp.eq.s32.totalorder %s14, 3
    %p43 = por %p41, %p42
    %p44 = scmp.ne.s32.totalorder %s36, %s39
    %p45 = scmp.eq.s32.totalorder %s14, 0
    %p46 = por %p44, %p45
    %p47 = scmp.ne.s32.totalorder %s36, %s39
    %p48 = scmp.eq.s32.totalorder %s19, 3
    %p49 = por %p47, %p48
    %p50 = scmp.ne.s32.totalorder %s39, %s40
    %p51 = scmp.eq.s32.totalorder %s19, 0
    %p52 = por %p50, %p51
    %p53 = scmp.ne.s32.totalorder %s39, %s40
    %p54 = scmp.eq.s32.totalorder %s20, 3
    %p55 = por %p53, %p54
    %p57 = scmp.ne.s32.totalorder %s40, %s56
    %p58 = scmp.eq.s32.totalorder %s20, 0
    %p59 = por %p57, %p58
    %s60 = ssub.s32 %s21, %s33
    %p61 = scmp.eq.s32.totalorder %s60, 0
    %s63 = sadd.s32 %s62, 1
    %s64 = scalar_select %p61, %s62, %s63
    %p67 = pneg %p61
    %p68 = scmp.eq.s32.totalorder %s14, 3
    %p69 = por %p67, %p68
    %p70 = scmp.ne.s32.totalorder %s62, %s65
    %p71 = scmp.eq.s32.totalorder %s14, 0
    %p72 = por %p70, %p71
    %p73 = scmp.ne.s32.totalorder %s62, %s65
    %p74 = scmp.eq.s32.totalorder %s19, 3
    %p75 = por %p73, %p74
    %p76 = scmp.ne.s32.totalorder %s65, %s66
    %p77 = scmp.eq.s32.totalorder %s19, 0
    %p78 = por %p76, %p77
    %p79 = scmp.ne.s32.totalorder %s65, %s66
    %p80 = scmp.eq.s32.totalorder %s20, 3
    %p81 = por %p79, %p80
    %p83 = scmp.ne.s32.totalorder %s66, %s82
    %p84 = scmp.eq.s32.totalorder %s20, 0
    %p85 = por %p83, %p84
    %s86 = ssub.s32 %s21, %s33
    %p87 = scmp.eq.s32.totalorder %s86, 0
    %s89 = sadd.s32 %s88, 1
    %s90 = scalar_select %p87, %s88, %s89
    %p93 = pneg %p87
    %p94 = scmp.eq.s32.totalorder %s14, 3
    %p95 = por %p93, %p94
    %p96 = scmp.ne.s32.totalorder %s88, %s91
    %p97 = scmp.eq.s32.totalorder %s14, 0
    %p98 = por %p96, %p97
    %p99 = scmp.ne.s32.totalorder %s88, %s91
    %p100 = scmp.eq.s32.totalorder %s19, 3
    %p101 = por %p99, %p100
    %p102 = scmp.ne.s32.totalorder %s91, %s92
    %p103 = scmp.eq.s32.totalorder %s19, 0
    %p104 = por %p102, %p103
    %p105 = scmp.ne.s32.totalorder %s91, %s92
    %p106 = scmp.eq.s32.totalorder %s20, 3
    %p107 = por %p105, %p106
    %p109 = scmp.ne.s32.totalorder %s92, %s108
    %p110 = scmp.eq.s32.totalorder %s20, 0
    %p111 = por %p109, %p110
    %s112 = ssub.s32 %s21, %s33
    %p113 = scmp.eq.s32.totalorder %s112, 0
    %s115 = sadd.s32 %s114, 1
    %s116 = scalar_select %p113, %s114, %s115
    %p119 = pneg %p113
    %p120 = scmp.eq.s32.totalorder %s14, 3
    %p121 = por %p119, %p120
    %p122 = scmp.ne.s32.totalorder %s114, %s117
    %p123 = scmp.eq.s32.totalorder %s14, 0
    %p124 = por %p122, %p123
    %p125 = scmp.ne.s32.totalorder %s114, %s117
    %p126 = scmp.eq.s32.totalorder %s19, 3
    %p127 = por %p125, %p126
    %p128 = scmp.ne.s32.totalorder %s117, %s118
    %p129 = scmp.eq.s32.totalorder %s19, 0
    %p130 = por %p128, %p129
    %p131 = scmp.ne.s32.totalorder %s117, %s118
    %p132 = scmp.eq.s32.totalorder %s20, 3
    %p133 = por %p131, %p132
    %p135 = scmp.ne.s32.totalorder %s118, %s134
    %p136 = scmp.eq.s32.totalorder %s20, 0
    %p137 = por %p135, %p136
    %s138 = ssub.s32 %s22, %s29
    %p139 = scmp.eq.s32.totalorder %s138, 0
    %s141 = sadd.s32 %s140, 1
    %s142 = scalar_select %p139, %s140, %s141
    %p145 = pneg %p139
    %p146 = scmp.eq.s32.totalorder %s14, 3
    %p147 = por %p145, %p146
    %p148 = scmp.ne.s32.totalorder %s140, %s143
    %p149 = scmp.eq.s32.totalorder %s14, 0
    %p150 = por %p148, %p149
    %p151 = scmp.ne.s32.totalorder %s140, %s143
    %p152 = scmp.eq.s32.totalorder %s19, 3
    %p153 = por %p151, %p152
    %p154 = scmp.ne.s32.totalorder %s143, %s144
    %p155 = scmp.eq.s32.totalorder %s19, 0
    %p156 = por %p154, %p155
    %p157 = scmp.ne.s32.totalorder %s143, %s144
    %p158 = scmp.eq.s32.totalorder %s20, 3
    %p159 = por %p157, %p158
    %p161 = scmp.ne.s32.totalorder %s144, %s160
    %p162 = scmp.eq.s32.totalorder %s20, 0
    %p163 = por %p161, %p162
    %s164 = ssub.s32 %s22, %s29
    %p165 = scmp.eq.s32.totalorder %s164, 0
    %s167 = sadd.s32 %s166, 1
    %s168 = scalar_select %p165, %s166, %s167
    %p171 = pneg %p165
    %p172 = scmp.eq.s32.totalorder %s14, 3
    %p173 = por %p171, %p172
    %p174 = scmp.ne.s32.totalorder %s166, %s169
    %p175 = scmp.eq.s32.totalorder %s14, 0
    %p176 = por %p174, %p175
    %p177 = scmp.ne.s32.totalorder %s166, %s169
    %p178 = scmp.eq.s32.totalorder %s19, 3
    %p179 = por %p177, %p178
    %p180 = scmp.ne.s32.totalorder %s169, %s170
    %p181 = scmp.eq.s32.totalorder %s19, 0
    %p182 = por %p180, %p181
    %p183 = scmp.ne.s32.totalorder %s169, %s170
    %p184 = scmp.eq.s32.totalorder %s20, 3
    %p185 = por %p183, %p184
    %p187 = scmp.ne.s32.totalorder %s170, %s186
    %p188 = scmp.eq.s32.totalorder %s20, 0
    %p189 = por %p187, %p188
    %s190 = ssub.s32 %s22, %s29
    %p191 = scmp.eq.s32.totalorder %s190, 0
    %s193 = sadd.s32 %s192, 1
    %s194 = scalar_select %p191, %s192, %s193
    %p197 = pneg %p191
    %p198 = scmp.eq.s32.totalorder %s14, 3
    %p199 = por %p197, %p198
    %p200 = scmp.ne.s32.totalorder %s192, %s195
    %p201 = scmp.eq.s32.totalorder %s14, 0
    %p202 = por %p200, %p201
    %p203 = scmp.ne.s32.totalorder %s192, %s195
    %p204 = scmp.eq.s32.totalorder %s19, 3
    %p205 = por %p203, %p204
    %p206 = scmp.ne.s32.totalorder %s195, %s196
    %p207 = scmp.eq.s32.totalorder %s19, 0
    %p208 = por %p206, %p207
    %p209 = scmp.ne.s32.totalorder %s195, %s196
    %p210 = scmp.eq.s32.totalorder %s20, 3
    %p211 = por %p209, %p210
    %p213 = scmp.ne.s32.totalorder %s196, %s212
    %p214 = scmp.eq.s32.totalorder %s20, 0
    %p215 = por %p213, %p214
    %s216 = ssub.s32 %s22, %s29
    %p217 = scmp.eq.s32.totalorder %s216, 0
    %s219 = sadd.s32 %s218, 1
    %s220 = scalar_select %p217, %s218, %s219
    %p223 = pneg %p217
    %p224 = scmp.eq.s32.totalorder %s14, 3
    %p225 = por %p223, %p224
    %p226 = scmp.ne.s32.totalorder %s218, %s221
    %p227 = scmp.eq.s32.totalorder %s14, 0
    %p228 = por %p226, %p227
    %p229 = scmp.ne.s32.totalorder %s218, %s221
    %p230 = scmp.eq.s32.totalorder %s19, 3
    %p231 = por %p229, %p230
    %p232 = scmp.ne.s32.totalorder %s221, %s222
    %p233 = scmp.eq.s32.totalorder %s19, 0
    %p234 = por %p232, %p233
    %p235 = scmp.ne.s32.totalorder %s221, %s222
    %p236 = scmp.eq.s32.totalorder %s20, 3
    %p237 = por %p235, %p236
    %p239 = scmp.ne.s32.totalorder %s222, %s238
    %p240 = scmp.eq.s32.totalorder %s20, 0
    %p241 = por %p239, %p240
    %s242 = ssub.s32 %s21, %s33
    %p243 = scmp.eq.s32.totalorder %s242, 0
    %s245 = sadd.s32 %s244, 1
    %s246 = scalar_select %p243, %s244, %s245
    %p249 = pneg %p243
    %p250 = scmp.eq.s32.totalorder %s14, 3
    %p251 = por %p249, %p250
    %p252 = scmp.ne.s32.totalorder %s244, %s247
    %p253 = scmp.eq.s32.totalorder %s14, 0
    %p254 = por %p252, %p253
    %p255 = scmp.ne.s32.totalorder %s244, %s247
    %p256 = scmp.eq.s32.totalorder %s19, 3
    %p257 = por %p255, %p256
    %p258 = scmp.ne.s32.totalorder %s247, %s248
    %p259 = scmp.eq.s32.totalorder %s19, 0
    %p260 = por %p258, %p259
    %p261 = scmp.ne.s32.totalorder %s247, %s248
    %p262 = scmp.eq.s32.totalorder %s20, 3
    %p263 = por %p261, %p262
    %p265 = scmp.ne.s32.totalorder %s248, %s264
    %p266 = scmp.eq.s32.totalorder %s20, 0
    %p267 = por %p265, %p266
    %p268 = scmp.le.s32.totalorder 1, %s14
    %p269 = scmp.lt.s32.totalorder %s14, 5
    %p270 = pnand %p268, %p269
    %p271 = pneg %p270
    // Predicated region
    $region9: #{multi_graph_conv_adapter.1} parent=5 // pred_check
      _
    $region10: #{multi_graph_conv_adapter.1} parent=5 // pred_check_branch
      %273 = sbr.rel (%p270) target = $region12
    $region11: #{multi_graph_conv_adapter.1} parent=5 // pred_region
      %s274 = ssub.s32 %s14, 1
    $region12: #{multi_graph_conv_adapter.1} parent=5 // pred_fallthru
      _
    %p275 = scmp.lt.s32.totalorder %s14, 4
    // Predicated region
    $region13: #{multi_graph_conv_adapter.1} parent=5 // pred_check
      %p276 = pneg %p275
    $region14: #{multi_graph_conv_adapter.1} parent=5 // pred_check_branch
      %278 = sbr.rel (%p276) target = $region16
    $region15: #{multi_graph_conv_adapter.1} parent=5 // pred_region
      // Predicated region
      $region17: #{multi_graph_conv_adapter.1} parent=15 // pred_check
        %p279 = pneg %p46
      $region18: #{multi_graph_conv_adapter.1} parent=15 // pred_check_branch
        %281 = sbr.rel (%p279) target = $region20
      $region19: #{multi_graph_conv_adapter.1} parent=15 // pred_region
        %s282 = smul.u32 2, %s21
        %p283 = scmp.lt.s32.totalorder %s282, 3
        %s284 = scalar_select %p283, %s282, 3
        %s285 = smul.addr %s284, 8
        %s286 = scalar_lea.vmem %s0, %s285
        %s287 = smul.u32 2, %s21
      $region20: #{multi_graph_conv_adapter.1} parent=15 // pred_fallthru
        _
      // Predicated region
      $region21: #{multi_graph_conv_adapter.1} parent=15 // pred_check
        %p288 = pneg %p72
      $region22: #{multi_graph_conv_adapter.1} parent=15 // pred_check_branch
        %290 = sbr.rel (%p288) target = $region24
      $region23: #{multi_graph_conv_adapter.1} parent=15 // pred_region
        %s291 = smul.u32 2, %s21
        %p292 = scmp.lt.s32.totalorder %s291, 3
        %s293 = scalar_select %p292, %s291, 3
        %s294 = smul.addr %s293, 8
        %s295 = scalar_lea.vmem %s1, %s294
        %s296 = smul.u32 2, %s21
      $region24: #{multi_graph_conv_adapter.1} parent=15 // pred_fallthru
        _
      // Predicated region
      $region25: #{multi_graph_conv_adapter.1} parent=15 // pred_check
        %p297 = pneg %p98
      $region26: #{multi_graph_conv_adapter.1} parent=15 // pred_check_branch
        %299 = sbr.rel (%p297) target = $region28
      $region27: #{multi_graph_conv_adapter.1} parent=15 // pred_region
        %s300 = smul.u32 2, %s21
        %p301 = scmp.lt.s32.totalorder %s300, 3
        %s302 = scalar_select %p301, %s300, 3
        %s303 = smul.addr %s302, 8
        %s304 = scalar_lea.vmem %s2, %s303
        %s305 = smul.u32 2, %s21
      $region28: #{multi_graph_conv_adapter.1} parent=15 // pred_fallthru
        _
      // Predicated region
      $region29: #{multi_graph_conv_adapter.1} parent=15 // pred_check
        %p306 = pneg %p124
      $region30: #{multi_graph_conv_adapter.1} parent=15 // pred_check_branch
        %308 = sbr.rel (%p306) target = $region32
      $region31: #{multi_graph_conv_adapter.1} parent=15 // pred_region
        %s309 = smul.u32 2, %s21
        %p310 = scmp.lt.s32.totalorder %s309, 3
        %s311 = scalar_select %p310, %s309, 3
        %s312 = smul.addr %s311, 8
        %s313 = scalar_lea.vmem %s3, %s312
        %s314 = smul.u32 2, %s21
      $region32: #{multi_graph_conv_adapter.1} parent=15 // pred_fallthru
        _
      // Predicated region
      $region33: #{multi_graph_conv_adapter.1} parent=15 // pred_check
        %p315 = pneg %p150
      $region34: #{multi_graph_conv_adapter.1} parent=15 // pred_check_branch
        %317 = sbr.rel (%p315) target = $region36
      $region35: #{multi_graph_conv_adapter.1} parent=15 // pred_region
        %p318 = scmp.lt.s32.totalorder %s22, 1
        %s319 = scalar_select %p318, %s22, 1
        %s320 = smul.addr %s319, 16
        %s321 = smul.addr %s320, 4
        %s322 = scalar_lea.vmem %s4, %s321
      $region36: #{multi_graph_conv_adapter.1} parent=15 // pred_fallthru
        _
      // Predicated region
      $region37: #{multi_graph_conv_adapter.1} parent=15 // pred_check
        %p323 = pneg %p176
      $region38: #{multi_graph_conv_adapter.1} parent=15 // pred_check_branch
        %325 = sbr.rel (%p323) target = $region40
      $region39: #{multi_graph_conv_adapter.1} parent=15 // pred_region
        %p326 = scmp.lt.s32.totalorder %s22, 1
        %s327 = scalar_select %p326, %s22, 1
        %s328 = scalar_lea.vmem %s5, %s327
      $region40: #{multi_graph_conv_adapter.1} parent=15 // pred_fallthru
        _
      // Predicated region
      $region41: #{multi_graph_conv_adapter.1} parent=15 // pred_check
        %p329 = pneg %p202
      $region42: #{multi_graph_conv_adapter.1} parent=15 // pred_check_branch
        %331 = sbr.rel (%p329) target = $region44
      $region43: #{multi_graph_conv_adapter.1} parent=15 // pred_region
        %p332 = scmp.lt.s32.totalorder %s22, 1
        %s333 = scalar_select %p332, %s22, 1
        %s334 = smul.addr %s333, 16
        %s335 = smul.addr %s334, 4
        %s336 = scalar_lea.vmem %s6, %s335
      $region44: #{multi_graph_conv_adapter.1} parent=15 // pred_fallthru
        _
      // Predicated region
      $region45: #{multi_graph_conv_adapter.1} parent=15 // pred_check
        %p337 = pneg %p228
      $region46: #{multi_graph_conv_adapter.1} parent=15 // pred_check_branch
        %339 = sbr.rel (%p337) target = $region48
      $region47: #{multi_graph_conv_adapter.1} parent=15 // pred_region
        %p340 = scmp.lt.s32.totalorder %s22, 1
        %s341 = scalar_select %p340, %s22, 1
        %s342 = scalar_lea.vmem %s7, %s341
      $region48: #{multi_graph_conv_adapter.1} parent=15 // pred_fallthru
        _
    $region16: #{multi_graph_conv_adapter.1} parent=5 // pred_fallthru
      _
    %p343 = scmp.le.s32.totalorder 1, %s14
    %p344 = scmp.lt.s32.totalorder %s14, 5
    %p345 = pnand %p343, %p344
    %p346 = pneg %p345
    // Predicated region
    $region49: #{multi_graph_conv_adapter.1} parent=5 // pred_check
      _
    $region50: #{multi_graph_conv_adapter.1} parent=5 // pred_check_branch
      %348 = sbr.rel (%p345) target = $region52
    $region51: #{multi_graph_conv_adapter.1} parent=5 // pred_region
      %s349 = ssub.s32 %s14, 1
      %s350 = smul.u32 2, %s23
      %p351 = scmp.lt.s32.totalorder %s350, 3
      %s352 = scalar_select %p351, %s350, 3
      %s353 = smul.addr %s352, 8
      %s354 = scalar_lea.vmem %s0, %s353
      %p355 = pneg %p52
      %p356 = pneg %p49
      %s357 = smul.u32 2, %s23
      %p358 = scmp.lt.s32.totalorder %s357, 3
      %s359 = scalar_select %p358, %s357, 3
      %s360 = smul.addr %s359, 8
      %s361 = scalar_lea.vmem %s1, %s360
      %p362 = pneg %p78
      %p363 = pneg %p75
      %s364 = smul.u32 2, %s23
      %p365 = scmp.lt.s32.totalorder %s364, 3
      %s366 = scalar_select %p365, %s364, 3
      %s367 = smul.addr %s366, 8
      %s368 = scalar_lea.vmem %s2, %s367
      %p369 = pneg %p104
      %p370 = pneg %p101
      %s371 = smul.u32 2, %s23
      %p372 = scmp.lt.s32.totalorder %s371, 3
      %s373 = scalar_select %p372, %s371, 3
      %s374 = smul.addr %s373, 8
      %s375 = scalar_lea.vmem %s3, %s374
      %p376 = pneg %p130
      %p377 = pneg %p127
      %p378 = scmp.lt.s32.totalorder %s24, 1
      %s379 = scalar_select %p378, %s24, 1
      %s380 = smul.addr %s379, 16
      %s381 = smul.addr %s380, 4
      %s382 = scalar_lea.vmem %s4, %s381
      %p383 = pneg %p156
      %p384 = pneg %p153
      %p385 = scmp.lt.s32.totalorder %s24, 1
      %s386 = scalar_select %p385, %s24, 1
      %s387 = scalar_lea.vmem %s5, %s386
      %p388 = pneg %p182
      %p389 = pneg %p179
      %p390 = scmp.lt.s32.totalorder %s24, 1
      %s391 = scalar_select %p390, %s24, 1
      %s392 = smul.addr %s391, 16
      %s393 = smul.addr %s392, 4
      %s394 = scalar_lea.vmem %s6, %s393
      %p395 = pneg %p208
      %p396 = pneg %p205
      %p397 = scmp.lt.s32.totalorder %s24, 1
      %s398 = scalar_select %p397, %s24, 1
      %s399 = scalar_lea.vmem %s7, %s398
      %p400 = pneg %p234
      %p401 = pneg %p231
      %p402 = pneg %p260
      %p403 = pneg %p257
      %s404 = smul.u32 2, %s23
      %p405 = scmp.lt.s32.totalorder %s404, 3
      %s406 = scalar_select %p405, %s404, 3
      %s407 = smul.addr %s406, 8
      %s408 = scalar_lea.vmem %s8, %s407
      %s409 = smul.u32 2, %s23
      %p410 = scmp.lt.s32.totalorder %s409, 3
      %s411 = scalar_select %p410, %s409, 3
      %s412 = smul.addr %s411, 8
      %s413 = scalar_lea.vmem %s0, %s412
      %s414 = smul.u32 2, %s23
      %s415 = smul.u32 2, %s23
      %p416 = scmp.lt.s32.totalorder %s415, 3
      %s417 = scalar_select %p416, %s415, 3
      %s418 = smul.addr %s417, 8
      %s419 = scalar_lea.vmem %s1, %s418
      %s420 = smul.u32 2, %s23
      %s421 = smul.u32 2, %s23
      %p422 = scmp.lt.s32.totalorder %s421, 3
      %s423 = scalar_select %p422, %s421, 3
      %s424 = smul.addr %s423, 8
      %s425 = scalar_lea.vmem %s2, %s424
      %s426 = smul.u32 2, %s23
      %s427 = smul.u32 2, %s23
      %p428 = scmp.lt.s32.totalorder %s427, 3
      %s429 = scalar_select %p428, %s427, 3
      %s430 = smul.addr %s429, 8
      %s431 = scalar_lea.vmem %s3, %s430
      %s432 = smul.u32 2, %s23
      %p433 = scmp.lt.s32.totalorder %s24, 1
      %s434 = scalar_select %p433, %s24, 1
      %s435 = smul.addr %s434, 16
      %s436 = smul.addr %s435, 4
      %s437 = scalar_lea.vmem %s4, %s436
      %p438 = scmp.lt.s32.totalorder %s24, 1
      %s439 = scalar_select %p438, %s24, 1
      %s440 = scalar_lea.vmem %s5, %s439
      %p441 = scmp.lt.s32.totalorder %s24, 1
      %s442 = scalar_select %p441, %s24, 1
      %s443 = smul.addr %s442, 16
      %s444 = smul.addr %s443, 4
      %s445 = scalar_lea.vmem %s6, %s444
      %p446 = scmp.lt.s32.totalorder %s24, 1
      %s447 = scalar_select %p446, %s24, 1
      %s448 = scalar_lea.vmem %s7, %s447
      %s449 = smul.u32 2, %s23
      %p450 = scmp.lt.s32.totalorder %s449, 3
      %s451 = scalar_select %p450, %s449, 3
      %s452 = smul.addr %s451, 8
      %s453 = scalar_lea.vmem %s8, %s452
      %s454 = smul.u32 2, %s23
      %p455 = scmp.eq.s32.totalorder %s24, 0
      // Predicated region
      $region53: #{multi_graph_conv_adapter.1} parent=51 // pred_check
        %p456 = pneg %p455
      $region54: #{multi_graph_conv_adapter.1} parent=51 // pred_check_branch
        %458 = sbr.rel (%p456) target = $region56
      $region55: #{multi_graph_conv_adapter.1} parent=51 // pred_region
        %v459 = vld [vmem:[%s413] sm:$0xff]
        %v460 = vld [vmem:[%s413 + $0x8] sm:$0xff]
        %461 = vst [vmem:[%s453] sm:$0xff] %v459
        %462 = vst [vmem:[%s453 + $0x8] sm:$0xff] %v460
      $region56: #{multi_graph_conv_adapter.1} parent=51 // pred_fallthru
        _
      %v463 = vld [vmem:[%s453] sm:$0xff]
      %v464 = vld [vmem:[%s453 + $0x8] sm:$0xff]
      %v465 = vpack.c.bf16 %v464, %v463
      %v466 = vld [vmem:[%s437] sm:$0xf]
      %v467 = vld [vmem:[%s437 + $0x4] sm:$0xf]
      %v468 = vld [vmem:[%s437 + $0x8] sm:$0xf]
      %v469 = vld [vmem:[%s437 + $0xc] sm:$0xf]
      %v470 = vld [vmem:[%s437 + $0x10] sm:$0xf]
      %v471 = vld [vmem:[%s437 + $0x14] sm:$0xf]
      %v472 = vld [vmem:[%s437 + $0x18] sm:$0xf]
      %v473 = vld [vmem:[%s437 + $0x1c] sm:$0xf]
      %v474 = vld [vmem:[%s437 + $0x20] sm:$0xf]
      %v475 = vld [vmem:[%s437 + $0x24] sm:$0xf]
      %v476 = vld [vmem:[%s437 + $0x28] sm:$0xf]
      %v477 = vld [vmem:[%s437 + $0x2c] sm:$0xf]
      %v478 = vld [vmem:[%s437 + $0x30] sm:$0xf]
      %v479 = vld [vmem:[%s437 + $0x34] sm:$0xf]
      %v480 = vld [vmem:[%s437 + $0x38] sm:$0xf]
      %v481 = vld [vmem:[%s437 + $0x3c] sm:$0xf]
      %v498 = vunpack.c.l.b16 %v466
      %v499 = vunpack.c.l.b16 %v467
      %v500 = vunpack.c.l.b16 %v468
      %v501 = vunpack.c.l.b16 %v469
      %v502 = vunpack.c.l.b16 %v470
      %v503 = vunpack.c.l.b16 %v471
      %v504 = vunpack.c.l.b16 %v472
      %v505 = vunpack.c.l.b16 %v473
      %v506 = vunpack.c.l.b16 %v474
      %v507 = vunpack.c.l.b16 %v475
      %v508 = vunpack.c.l.b16 %v476
      %v509 = vunpack.c.l.b16 %v477
      %v510 = vunpack.c.l.b16 %v478
      %v511 = vunpack.c.l.b16 %v479
      %v512 = vunpack.c.l.b16 %v480
      %v513 = vunpack.c.l.b16 %v481
      %v514 = vpack.c.b16 %v499, %v498
      %v515 = vpack.c.b16 %v501, %v500
      %v516 = vpack.c.b16 %v503, %v502
      %v517 = vpack.c.b16 %v505, %v504
      %v518 = vpack.c.b16 %v507, %v506
      %v519 = vpack.c.b16 %v509, %v508
      %v520 = vpack.c.b16 %v511, %v510
      %v521 = vpack.c.b16 %v513, %v512
      %530 = vmatpush.bf16.msra.mxu0 %v521
      %531 = vmatpush.bf16.msra.mxu0 %v520
      %532 = vmatpush.bf16.msra.mxu0 %v519
      %533 = vmatpush.bf16.msra.mxu0 %v518
      %534 = vmatpush.bf16.msra.mxu0 %v517
      %535 = vmatpush.bf16.msra.mxu0 %v516
      %536 = vmatpush.bf16.msra.mxu0 %v515
      %537 = vmatpush.bf16.msra.mxu0 %v514
      %538 = vmatmul.bf16.gmra.mxu0 %v465
      %v539 = vpop.f32.mrf.mxu0
      %v540 = vadd.f32 0.0, %v539
      %v541 = vpop.f32.mrf.mxu0
      %v542 = vadd.f32 0.0, %v541
      %543 = vdwg.mxu0
      %v544 = vrot.slane %v540, 7
      %v545 = vrot.slane %v542, 7
      %v546 = vlaneseq
      %v547 = vshrl.u32 %v546, 7
      %vm548 = vcmp.lt.s32.totalorder %v547, 1
      %v549 = vsel %vm548, %v544, %v545
      %v550 = vsel %vm548, %v545, %v544
      %v551 = vrot.slane %v540, 1
      %v552 = vrot.slane %v542, 1
      %vm553 = vcmp.lt.s32.totalorder %v547, 7
      %v554 = vsel %vm553, %v551, %v552
      %v555 = vsel %vm553, %v552, %v551
      %v556 = vld [vmem:[%s419] sm:$0xff]
      %v557 = vld [vmem:[%s419 + $0x8] sm:$0xff]
      %559 = vset.pattern.permute.xlu0 0
      %560 = vperm.xlu0 %559, %v556
      %v561 = vpop.permute.xlu0 %560
      %564 = vset.pattern.permute.xlu0 0
      %565 = vperm.xlu0 %564, %v557
      %v566 = vpop.permute.xlu0 %565
      %v568 = vmul.f32 %v561, %v550
      %v569 = vmul.f32 %v566, %v549
      %v570 = vld [vmem:[%s425] sm:$0xff]
      %v571 = vld [vmem:[%s425 + $0x8] sm:$0xff]
      %573 = vset.pattern.permute.xlu0 0
      %574 = vperm.xlu0 %573, %v570
      %v575 = vpop.permute.xlu0 %574
      %578 = vset.pattern.permute.xlu0 0
      %579 = vperm.xlu0 %578, %v571
      %v580 = vpop.permute.xlu0 %579
      %v582 = vmul.f32 %v575, %v554
      %v583 = vmul.f32 %v580, %v555
      %v584 = vadd.f32 %v568, %v582
      %v585 = vadd.f32 %v569, %v583
      %v586 = vld [vmem:[%s440] sm:$0x1]
      %v588 = vperm.slane %v586, 0
      %v590 = vadd.f32 %v584, %v588
      %v591 = vadd.f32 %v585, %v588
      %v592 = vmul.f32 %v590, 0.5
      %v593 = vmul.f32 %v591, 0.5
      %v594 = vmul.f32 %v590, 0.70710677
      %v595 = vmul.f32 %v591, 0.70710677
      %vm596 = vcmp.ge.f32.partialorder %v594, 0.0
      %vm597 = vcmp.ge.f32.partialorder %v595, 0.0
      %v598 = vsel %vm596, 1.0, -1.0
      %v599 = vsel %vm597, 1.0, -1.0
      %v600 = vand.u32 2147483647, %v594
      %v601 = vand.u32 2147483647, %v595
      %v602 = vmul.f32 %v600, 0.3275911
      %v603 = vmul.f32 %v601, 0.3275911
      %v604 = vadd.f32 %v602, 1.0
      %v605 = vadd.f32 %v603, 1.0
      %v606 = vrcp.pop %v604
      %v607 = vmul.f32 %v604, %v606
      %v608 = vsub.f32 1.0, %v607
      %v609 = vmul.f32 %v606, %v608
      %v610 = vadd.f32 %v606, %v609
      %vm611 = vweird.f32 %v604
      %vm612 = vweird.f32 %v606
      %vm613 = vmor %vm611, %vm612
      %v614 = vsel %vm613, %v606, %v610
      %v615 = vand.u32 2147483647, %v604
      %vm616 = vcmp.eq.f32.partialorder %v615, 8.507059e+37
      %v617 = vand.u32 %v604, 2147483648
      %v618 = vor.u32 1.1754944e-38, %v617
      %v619 = vsel %vm616, %v618, %v614
      %v620 = vmul.f32 1.0, %v619
      %v621 = vrcp.pop %v605
      %v622 = vmul.f32 %v605, %v621
      %v623 = vsub.f32 1.0, %v622
      %v624 = vmul.f32 %v621, %v623
      %v625 = vadd.f32 %v621, %v624
      %vm626 = vweird.f32 %v605
      %vm627 = vweird.f32 %v621
      %vm628 = vmor %vm626, %vm627
      %v629 = vsel %vm628, %v621, %v625
      %v630 = vand.u32 2147483647, %v605
      %vm631 = vcmp.eq.f32.partialorder %v630, 8.507059e+37
      %v632 = vand.u32 %v605, 2147483648
      %v633 = vor.u32 1.1754944e-38, %v632
      %v634 = vsel %vm631, %v633, %v629
      %v635 = vmul.f32 1.0, %v634
      %v636 = vmul.f32 %v620, 1.0614054
      %v637 = vmul.f32 %v635, 1.0614054
      %v638 = vadd.f32 %v636, -1.4531521
      %v639 = vadd.f32 %v637, -1.4531521
      %v640 = vmul.f32 %v620, %v638
      %v641 = vmul.f32 %v635, %v639
      %v642 = vadd.f32 %v640, 1.4214138
      %v643 = vadd.f32 %v641, 1.4214138
      %v644 = vmul.f32 %v620, %v642
      %v645 = vmul.f32 %v635, %v643
      %v646 = vadd.f32 %v644, -0.28449672
      %v647 = vadd.f32 %v645, -0.28449672
      %v648 = vmul.f32 %v620, %v646
      %v649 = vmul.f32 %v635, %v647
      %v650 = vadd.f32 %v648, 0.2548296
      %v651 = vadd.f32 %v649, 0.2548296
      %v652 = vmul.f32 %v620, %v650
      %v653 = vmul.f32 %v635, %v651
      %v654 = vsub.f32 0.0, %v600
      %v655 = vsub.f32 0.0, %v601
      %v656 = vmul.f32 %v654, %v600
      %v657 = vmul.f32 %v655, %v601
      %v658 = vmul.f32 %v656, 1.442695
      %v659 = vpow.pop %v658
      %v660 = vmul.f32 %v657, 1.442695
      %v661 = vpow.pop %v660
      %v662 = vmul.f32 %v652, %v659
      %v663 = vmul.f32 %v653, %v661
      %v664 = vsub.f32 1.0, %v662
      %v665 = vsub.f32 1.0, %v663
      %v666 = vmul.f32 %v598, %v664
      %v667 = vmul.f32 %v599, %v665
      %v668 = vadd.f32 %v666, 1.0
      %v669 = vadd.f32 %v667, 1.0
      %v670 = vmul.f32 %v592, %v668
      %v671 = vmul.f32 %v593, %v669
      %v672 = vpack.c.bf16 %v671, %v670
      %v673 = vld [vmem:[%s445] sm:$0xf]
      %v674 = vld [vmem:[%s445 + $0x4] sm:$0xf]
      %v675 = vld [vmem:[%s445 + $0x8] sm:$0xf]
      %v676 = vld [vmem:[%s445 + $0xc] sm:$0xf]
      %v677 = vld [vmem:[%s445 + $0x10] sm:$0xf]
      %v678 = vld [vmem:[%s445 + $0x14] sm:$0xf]
      %v679 = vld [vmem:[%s445 + $0x18] sm:$0xf]
      %v680 = vld [vmem:[%s445 + $0x1c] sm:$0xf]
      %v681 = vld [vmem:[%s445 + $0x20] sm:$0xf]
      %v682 = vld [vmem:[%s445 + $0x24] sm:$0xf]
      %v683 = vld [vmem:[%s445 + $0x28] sm:$0xf]
      %v684 = vld [vmem:[%s445 + $0x2c] sm:$0xf]
      %v685 = vld [vmem:[%s445 + $0x30] sm:$0xf]
      %v686 = vld [vmem:[%s445 + $0x34] sm:$0xf]
      %v687 = vld [vmem:[%s445 + $0x38] sm:$0xf]
      %v688 = vld [vmem:[%s445 + $0x3c] sm:$0xf]
      %v689 = vld [vmem:[%s448] sm:$0x1]
      %v691 = vperm.slane %v689, 0
      %v709 = vunpack.c.l.b16 %v673
      %v710 = vunpack.c.l.b16 %v674
      %v711 = vunpack.c.l.b16 %v675
      %v712 = vunpack.c.l.b16 %v676
      %v713 = vunpack.c.l.b16 %v677
      %v714 = vunpack.c.l.b16 %v678
      %v715 = vunpack.c.l.b16 %v679
      %v716 = vunpack.c.l.b16 %v680
      %v717 = vunpack.c.l.b16 %v681
      %v718 = vunpack.c.l.b16 %v682
      %v719 = vunpack.c.l.b16 %v683
      %v720 = vunpack.c.l.b16 %v684
      %v721 = vunpack.c.l.b16 %v685
      %v722 = vunpack.c.l.b16 %v686
      %v723 = vunpack.c.l.b16 %v687
      %v724 = vunpack.c.l.b16 %v688
      %v725 = vpack.c.b16 %v710, %v709
      %v726 = vpack.c.b16 %v712, %v711
      %v727 = vpack.c.b16 %v714, %v713
      %v728 = vpack.c.b16 %v716, %v715
      %v729 = vpack.c.b16 %v718, %v717
      %v730 = vpack.c.b16 %v720, %v719
      %v731 = vpack.c.b16 %v722, %v721
      %v732 = vpack.c.b16 %v724, %v723
      %741 = vmatpush.bf16.msra.mxu0 %v732
      %742 = vmatpush.bf16.msra.mxu0 %v731
      %743 = vmatpush.bf16.msra.mxu0 %v730
      %744 = vmatpush.bf16.msra.mxu0 %v729
      %745 = vmatpush.bf16.msra.mxu0 %v728
      %746 = vmatpush.bf16.msra.mxu0 %v727
      %747 = vmatpush.bf16.msra.mxu0 %v726
      %748 = vmatpush.bf16.msra.mxu0 %v725
      %749 = vmatmul.bf16.gmra.mxu0 %v672
      %v750 = vpop.f32.mrf.mxu0
      %v751 = vadd.f32 %v691, %v750
      %v752 = vpop.f32.mrf.mxu0
      %v753 = vadd.f32 %v691, %v752
      %754 = vdwg.mxu0
      %v755 = vld [vmem:[%s431] sm:$0xff]
      %v756 = vld [vmem:[%s431 + $0x8] sm:$0xff]
      %758 = vset.pattern.permute.xlu0 0
      %759 = vperm.xlu0 %758, %v755
      %v760 = vpop.permute.xlu0 %759
      %763 = vset.pattern.permute.xlu0 0
      %764 = vperm.xlu0 %763, %v756
      %v765 = vpop.permute.xlu0 %764
      %v767 = vmul.f32 %v760, %v751
      %v768 = vmul.f32 %v765, %v753
      %v769 = vadd.f32 %v463, %v767
      %v770 = vadd.f32 %v464, %v768
      %771 = vst [vmem:[%s453] sm:$0xff] %v769
      %772 = vst [vmem:[%s453 + $0x8] sm:$0xff] %v770
      %s773 = smul.u32 2, %s23
      %p774 = scmp.lt.s32.totalorder %s773, 3
      %s775 = scalar_select %p774, %s773, 3
      %s776 = smul.addr %s775, 8
      %s777 = scalar_lea.vmem %s8, %s776
      // Predicated region
      $region57: #{multi_graph_conv_adapter.1} parent=51 // pred_check
        %p778 = pneg %p257
      $region58: #{multi_graph_conv_adapter.1} parent=51 // pred_check_branch
        %780 = sbr.rel (%p778) target = $region60
      $region59: #{multi_graph_conv_adapter.1} parent=51 // pred_region
        %s781 = smul.u32 2, %s23
      $region60: #{multi_graph_conv_adapter.1} parent=51 // pred_fallthru
        _
    $region52: #{multi_graph_conv_adapter.1} parent=5 // pred_fallthru
      _
    %p782 = scmp.le.s32.totalorder 2, %s14
    // Predicated region
    $region61: #{multi_graph_conv_adapter.1} parent=5 // pred_check
      %p783 = pneg %p782
    $region62: #{multi_graph_conv_adapter.1} parent=5 // pred_check_branch
      %785 = sbr.rel (%p783) target = $region64
    $region63: #{multi_graph_conv_adapter.1} parent=5 // pred_region
      %s786 = ssub.s32 %s14, 2
      // Predicated region
      $region65: #{multi_graph_conv_adapter.1} parent=63 // pred_check
        %p787 = pneg %p263
      $region66: #{multi_graph_conv_adapter.1} parent=63 // pred_check_branch
        %789 = sbr.rel (%p787) target = $region68
      $region67: #{multi_graph_conv_adapter.1} parent=63 // pred_region
        %s790 = smul.u32 2, %s25
        %p791 = scmp.lt.s32.totalorder %s790, 3
        %s792 = scalar_select %p791, %s790, 3
        %s793 = smul.addr %s792, 8
        %s794 = scalar_lea.vmem %s8, %s793
      $region68: #{multi_graph_conv_adapter.1} parent=63 // pred_fallthru
        _
    $region64: #{multi_graph_conv_adapter.1} parent=5 // pred_fallthru
      _
  $region6: #{multi_graph_conv_adapter.1} parent=0 // loop_footer
    %s18 = sadd.s32 1, %s14
  $region7: #{multi_graph_conv_adapter.1} parent=0 // loop_footer_branch
    %13 = sbr.rel target = $region3
  $region8: #{multi_graph_conv_adapter.1} parent=0 // loop_exit
    _

</llo_original>
